<compile_context>
chip_gen: v7x
topology: tpu7x:2x2x1
jax: 0.10.0
libtpu: 0.0.40
codegen_flags: <defaults>
</compile_context>

<pallas_src>
import math
from functools import partial

import jax
import jax.numpy as jnp
from jax.experimental import pallas as pl
from jax.experimental.pallas import tpu as pltpu


def _round_up(a, b):
    return ((a + b - 1) // b) * b


def _pad_rows(a, rows):
    if a.shape[0] == rows:
        return a
    pad = [(0, rows - a.shape[0])] + [(0, 0)] * (a.ndim - 1)
    return jnp.pad(a, pad)


def _rotate_pairs(x):
    """r[..., 2j] = -x[..., 2j+1], r[..., 2j+1] = x[..., 2j]  (even/odd swizzle on the XLU)."""
    d = x.shape[-1]
    ax = x.ndim - 1
    fwd = pltpu.roll(x, shift=1, axis=ax)       # fwd[j] = x[j-1]
    bwd = pltpu.roll(x, shift=d - 1, axis=ax)   # bwd[j] = x[j+1]
    lane = jax.lax.broadcasted_iota(jnp.int32, x.shape, ax)
    return jnp.where(lane % 2 == 0, -bwd, fwd)


# x @ W.T for PyTorch (out_features, in_features) weights, without materializing a transpose.
_NT = (((1,), (1,)), ((), ()))


def _qkv_rope_kernel(x_ref, wq_ref, wk_ref, wv_ref, cos_ref, sin_ref,
                     q_ref, k_ref, v_ref):
    x = x_ref[...]
    q = jax.lax.dot_general(x, wq_ref[...], _NT, preferred_element_type=jnp.float32)
    k = jax.lax.dot_general(x, wk_ref[...], _NT, preferred_element_type=jnp.float32)
    v = jax.lax.dot_general(x, wv_ref[...], _NT, preferred_element_type=jnp.float32)
    cos = cos_ref[...]                       # (tm, n_heads*head_dim), interleaved + head-tiled
    sin = sin_ref[...]
    dk = k.shape[-1]
    q = q * cos + _rotate_pairs(q) * sin
    k = k * cos[:, :dk] + _rotate_pairs(k) * sin[:, :dk]
    q_ref[...] = q.astype(q_ref.dtype)
    k_ref[...] = k.astype(k_ref.dtype)
    v_ref[...] = v.astype(v_ref.dtype)


def _flash_attn_kernel(q_ref, k_ref, v_ref, mask_ref, o_ref,
                       m_sc, l_sc, acc_sc, *, scale):
    ki = pl.program_id(3)

    @pl.when(ki == 0)
    def _():
        # -1e30 (not -inf) so fully-masked kv tiles never produce -inf minus -inf NaNs.
        m_sc[...] = jnp.full(m_sc.shape, -1e30, m_sc.dtype)
        l_sc[...] = jnp.zeros(l_sc.shape, l_sc.dtype)
        acc_sc[...] = jnp.zeros(acc_sc.shape, acc_sc.dtype)

    q = q_ref[0, 0]                          # (tq, head_dim)
    k = k_ref[0, 0]                          # (tk, head_dim)
    v = v_ref[0, 0]
    s = jax.lax.dot_general(q, k, _NT, preferred_element_type=jnp.float32) * scale
    s = s + mask_ref[...]                    # additive mask (e.g. causal -inf upper triangle)

    m_prev = m_sc[...]
    m_new = jnp.maximum(m_prev, s.max(axis=-1, keepdims=True))
    alpha = jnp.exp(m_prev - m_new)
    p = jnp.exp(s - m_new)
    l_sc[...] = alpha * l_sc[...] + p.sum(axis=-1, keepdims=True)
    acc_sc[...] = alpha * acc_sc[...] + jnp.dot(
        p.astype(v.dtype), v, preferred_element_type=jnp.float32)
    m_sc[...] = m_new

    @pl.when(ki == pl.num_programs(3) - 1)
    def _():
        # TODO(synk): switch to pl.reciprocal(..., approx=True) for production throughput.
        o_ref[0, 0] = (acc_sc[...] / l_sc[...]).astype(o_ref.dtype)


def _out_proj_kernel(a_ref, wo_ref, o_ref):
    o = jax.lax.dot_general(a_ref[...], wo_ref[...], _NT,
                            preferred_element_type=jnp.float32)
    o_ref[...] = o.astype(o_ref.dtype)


def attention_forward(x, wq, wk, wv, wo, cos, sin, mask=None, *,
                      n_heads, n_kv_heads, tm=256, tq=128, tk=128):
    """LLaMA Attention forward (adapter=None). Weights in PyTorch (out, in) layout.
    cos/sin are the real/imag parts of freqs_cis, shape (seqlen, head_dim // 2)."""
    B, S, dim = x.shape
    hd = dim // n_heads
    dq = n_heads * hd
    dkv = n_kv_heads * hd
    n_rep = n_heads // n_kv_heads
    M = B * S
    isz = 4  # cost-estimate bookkeeping (f32-equivalent bytes)

    # ---- 1) fused QKV projection + rotary, tiled over rows of (B*S, dim) ----
    tm = min(tm, _round_up(M, 8))
    m_pad = _round_up(M, tm)
    x2d = _pad_rows(x.reshape(M, dim), m_pad)

    # interleave cos/sin up to head_dim and tile across heads / batch rows -> (m_pad, dq)
    cos_i = jnp.repeat(cos.astype(jnp.float32), 2, axis=-1)   # (S, hd): [c0,c0,c1,c1,...]
    sin_i = jnp.repeat(sin.astype(jnp.float32), 2, axis=-1)
    cos_f = _pad_rows(jnp.tile(jnp.tile(cos_i, (1, n_heads)), (B, 1)), m_pad)
    sin_f = _pad_rows(jnp.tile(jnp.tile(sin_i, (1, n_heads)), (B, 1)), m_pad)

    # TODO(synk): for production dims (dim >= 4096) tile the weight contraction/output axes and
    # stream bf16 weight tiles with an f32 accumulator instead of keeping them VMEM-resident.
    q2d, k2d, v2d = pl.pallas_call(
        _qkv_rope_kernel,
        out_shape=(jax.ShapeDtypeStruct((m_pad, dq), x.dtype),
                   jax.ShapeDtypeStruct((m_pad, dkv), x.dtype),
                   jax.ShapeDtypeStruct((m_pad, dkv), x.dtype)),
        grid_spec=pltpu.PrefetchScalarGridSpec(
            num_scalar_prefetch=0,
            grid=(m_pad // tm,),
            in_specs=[
                pl.BlockSpec((tm, dim), lambda i: (i, 0)),     # x rows
                pl.BlockSpec((dq, dim), lambda i: (0, 0)),     # Wq (out, in)
                pl.BlockSpec((dkv, dim), lambda i: (0, 0)),    # Wk
                pl.BlockSpec((dkv, dim), lambda i: (0, 0)),    # Wv
                pl.BlockSpec((tm, dq), lambda i: (i, 0)),      # cos (flat, interleaved)
                pl.BlockSpec((tm, dq), lambda i: (i, 0)),      # sin
            ],
            out_specs=[
                pl.BlockSpec((tm, dq), lambda i: (i, 0)),
                pl.BlockSpec((tm, dkv), lambda i: (i, 0)),
                pl.BlockSpec((tm, dkv), lambda i: (i, 0)),
            ]),
        compiler_params=pltpu.CompilerParams(
            dimension_semantics=("parallel",),
            vmem_limit_bytes=48 * 1024 * 1024),
        cost_estimate=pl.CostEstimate(
            flops=int(2 * m_pad * dim * (dq + 2 * dkv)),
            transcendentals=0,
            bytes_accessed=int(isz * (m_pad * dim + dim * (dq + 2 * dkv)
                                      + 3 * m_pad * dq + 2 * m_pad * dkv))),
    )(x2d, wq, wk, wv, cos_f, sin_f)

    q = q2d[:M].reshape(B, S, n_heads, hd).transpose(0, 2, 1, 3)      # (B, H,  S, hd)
    k = k2d[:M].reshape(B, S, n_kv_heads, hd).transpose(0, 2, 1, 3)   # (B, Hkv,S, hd)
    v = v2d[:M].reshape(B, S, n_kv_heads, hd).transpose(0, 2, 1, 3)

    # ---- 2) flash attention (online softmax), GQA via k/v index_map ----
    tq = min(tq, S)
    tk = min(tk, S)
    # TODO(synk): pad/mask ragged sequence tiles; demo shapes divide evenly.
    assert S % tq == 0 and S % tk == 0, "seqlen must divide the q/kv tiles"

    if mask is None:
        mask2d = jnp.zeros((S, S), jnp.float32)
    else:
        mask2d = mask.astype(jnp.float32).reshape(mask.shape[-2], mask.shape[-1])

    scale = 1.0 / math.sqrt(hd)
    o = pl.pallas_call(
        partial(_flash_attn_kernel, scale=scale),
        out_shape=jax.ShapeDtypeStruct((B, n_heads, S, hd), x.dtype),
        grid_spec=pltpu.PrefetchScalarGridSpec(
            num_scalar_prefetch=0,
            grid=(B, n_heads, S // tq, S // tk),
            in_specs=[
                pl.BlockSpec((1, 1, tq, hd), lambda b, h, qi, ki: (b, h, qi, 0)),
                pl.BlockSpec((1, 1, tk, hd), lambda b, h, qi, ki: (b, h // n_rep, ki, 0)),
                pl.BlockSpec((1, 1, tk, hd), lambda b, h, qi, ki: (b, h // n_rep, ki, 0)),
                pl.BlockSpec((tq, tk), lambda b, h, qi, ki: (qi, ki)),
            ],
            out_specs=pl.BlockSpec((1, 1, tq, hd), lambda b, h, qi, ki: (b, h, qi, 0)),
            scratch_shapes=[pltpu.VMEM((tq, 1), jnp.float32),     # running max
                            pltpu.VMEM((tq, 1), jnp.float32),     # running denom
                            pltpu.VMEM((tq, hd), jnp.float32)]),  # f32 accumulator
        compiler_params=pltpu.CompilerParams(
            dimension_semantics=("parallel", "parallel", "parallel", "arbitrary"),
            vmem_limit_bytes=48 * 1024 * 1024),
        cost_estimate=pl.CostEstimate(
            flops=int(4 * B * n_heads * S * S * hd),
            transcendentals=int(B * n_heads * S * S),
            bytes_accessed=int(isz * (2 * B * n_heads * S * hd
                                      + 2 * B * n_kv_heads * S * hd + S * S))),
    )(q, k, v, mask2d)

    # ---- 3) output projection ----
    a2d = _pad_rows(o.transpose(0, 2, 1, 3).reshape(M, dq), m_pad)
    out2d = pl.pallas_call(
        _out_proj_kernel,
        out_shape=jax.ShapeDtypeStruct((m_pad, dim), x.dtype),
        grid_spec=pltpu.PrefetchScalarGridSpec(
            num_scalar_prefetch=0,
            grid=(m_pad // tm,),
            in_specs=[pl.BlockSpec((tm, dq), lambda i: (i, 0)),
                      pl.BlockSpec((dim, dq), lambda i: (0, 0))],
            out_specs=pl.BlockSpec((tm, dim), lambda i: (i, 0))),
        compiler_params=pltpu.CompilerParams(
            dimension_semantics=("parallel",),
            vmem_limit_bytes=48 * 1024 * 1024),
        cost_estimate=pl.CostEstimate(
            flops=int(2 * m_pad * dq * dim),
            transcendentals=0,
            bytes_accessed=int(isz * (m_pad * dq + dim * dq + m_pad * dim))),
    )(a2d, wo)

    return out2d[:M].reshape(B, S, dim)


def _reference(x, wq, wk, wv, wo, cos, sin, mask, n_heads, n_kv_heads):
    """Plain-JAX replica of the PyTorch Attention.forward (adapter=None)."""
    hp = jax.lax.Precision.HIGHEST
    B, S, dim = x.shape
    hd = dim // n_heads
    n_rep = n_heads // n_kv_heads
    q = jnp.einsum('bsd,od->bso', x, wq, precision=hp).reshape(B, S, n_heads, hd)
    k = jnp.einsum('bsd,od->bso', x, wk, precision=hp).reshape(B, S, n_kv_heads, hd)
    v = jnp.einsum('bsd,od->bso', x, wv, precision=hp).reshape(B, S, n_kv_heads, hd)

    def rope(t):
        t2 = t.reshape(*t.shape[:-1], hd // 2, 2)
        tr, ti = t2[..., 0], t2[..., 1]
        c = cos[None, :, None, :]
        s = sin[None, :, None, :]
        out = jnp.stack([tr * c - ti * s, tr * s + ti * c], axis=-1)
        return out.reshape(t.shape)

    q, k = rope(q), rope(k)
    k = jnp.repeat(k, n_rep, axis=2)
    v = jnp.repeat(v, n_rep, axis=2)
    q, k, v = (t.transpose(0, 2, 1, 3) for t in (q, k, v))
    scores = jnp.einsum('bhqd,bhkd->bhqk', q, k, precision=hp) / math.sqrt(hd)
    scores = scores + mask[None, None]
    probs = jax.nn.softmax(scores, axis=-1)
    out = jnp.einsum('bhqk,bhkd->bhqd', probs, v, precision=hp)
    out = out.transpose(0, 2, 1, 3).reshape(B, S, n_heads * hd)
    return jnp.einsum('bso,do->bsd', out, wo, precision=hp)


if __name__ == "__main__":
    dim, n_heads, n_kv_heads = 256, 4, 2          # head_dim = 64, GQA n_rep = 2
    head_dim = dim // n_heads
    bsz, seqlen = 2, 16
    rope_theta = 500000.0

    key = jax.random.PRNGKey(0)
    kx, kq, kk, kv_, ko = jax.random.split(key, 5)
    x = jax.random.normal(kx, (bsz, seqlen, dim), jnp.float32)
    std = 1.0 / math.sqrt(dim)
    wq = jax.random.uniform(kq, (n_heads * head_dim, dim), jnp.float32, -std, std)
    wk = jax.random.uniform(kk, (n_kv_heads * head_dim, dim), jnp.float32, -std, std)
    wv = jax.random.uniform(kv_, (n_kv_heads * head_dim, dim), jnp.float32, -std, std)
    wo = jax.random.uniform(ko, (dim, n_heads * head_dim), jnp.float32, -std, std)

    # freqs_cis (cos/sin of the rotary angles), as in llama precompute_freqs_cis (unscaled)
    inv_freq = 1.0 / (rope_theta ** (jnp.arange(0, head_dim, 2, dtype=jnp.float32) / head_dim))
    angles = jnp.outer(jnp.arange(seqlen, dtype=jnp.float32), inv_freq)   # (S, hd // 2)
    cos, sin = jnp.cos(angles), jnp.sin(angles)

    # causal mask as built by the llama Transformer for start_pos = 0
    mask = jnp.triu(jnp.full((seqlen, seqlen), -jnp.inf, dtype=jnp.float32), k=1)

    out = attention_forward(x, wq, wk, wv, wo, cos, sin, mask,
                            n_heads=n_heads, n_kv_heads=n_kv_heads)
    out = jax.block_until_ready(out)

    ref = _reference(x, wq, wk, wv, wo, cos, sin, mask, n_heads, n_kv_heads)
    assert out.shape == (bsz, seqlen, dim)
    err = jnp.max(jnp.abs(out - ref))
    assert jnp.allclose(out, ref, atol=1e-2, rtol=1e-2), f"mismatch vs reference, max err {err}"
    print("KERNEL_OK")
</pallas_src>

<mosaic_0001>
module attributes {stable_mosaic.version = 11 : i64} {
  func.func @_qkv_rope_kernel(%arg0: i32, %arg1: memref<32x256xf32, #tpu.memory_space<vmem>>, %arg2: memref<256x256xf32, #tpu.memory_space<vmem>>, %arg3: memref<128x256xf32, #tpu.memory_space<vmem>>, %arg4: memref<128x256xf32, #tpu.memory_space<vmem>>, %arg5: memref<32x256xf32, #tpu.memory_space<vmem>>, %arg6: memref<32x256xf32, #tpu.memory_space<vmem>>, %arg7: memref<32x256xf32, #tpu.memory_space<vmem>>, %arg8: memref<32x128xf32, #tpu.memory_space<vmem>>, %arg9: memref<32x128xf32, #tpu.memory_space<vmem>>) attributes {dimension_semantics = [#tpu.dimension_semantics<parallel>], iteration_bounds = array<i64: 1>, scalar_prefetch = 0 : i64, scratch_operands = 0 : i64, tpu.core_type = #tpu.core_type<tc>, window_params = [{transform_indices = @transform_0, window_bounds = array<i64: 32, 256>}, {pipeline_mode = #tpu.pipeline_mode<synchronous>, transform_indices = @transform_1, window_bounds = array<i64: 256, 256>}, {pipeline_mode = #tpu.pipeline_mode<synchronous>, transform_indices = @transform_2, window_bounds = array<i64: 128, 256>}, {pipeline_mode = #tpu.pipeline_mode<synchronous>, transform_indices = @transform_3, window_bounds = array<i64: 128, 256>}, {transform_indices = @transform_4, window_bounds = array<i64: 32, 256>}, {transform_indices = @transform_5, window_bounds = array<i64: 32, 256>}, {transform_indices = @transform_6, window_bounds = array<i64: 32, 256>}, {transform_indices = @transform_7, window_bounds = array<i64: 32, 128>}, {transform_indices = @transform_8, window_bounds = array<i64: 32, 128>}]} {
    %c0 = arith.constant 0 : index
    %c0_0 = arith.constant 0 : index
    %0 = vector.load %arg1[%c0, %c0_0] : memref<32x256xf32, #tpu.memory_space<vmem>>, vector<32x256xf32>
    %c0_1 = arith.constant 0 : index
    %c0_2 = arith.constant 0 : index
    %1 = vector.load %arg2[%c0_1, %c0_2] : memref<256x256xf32, #tpu.memory_space<vmem>>, vector<256x256xf32>
    %cst = arith.constant dense<0.000000e+00> : vector<32x256xf32>
    %2 = tpu.matmul %0, %1, %cst {dimension_numbers = #tpu.dot_dimension_numbers<[1], [1], [0], [0], [0, 0, 1, 0], [], []>} : vector<32x256xf32>, vector<256x256xf32>, vector<32x256xf32> -> vector<32x256xf32>
    %c0_3 = arith.constant 0 : index
    %c0_4 = arith.constant 0 : index
    %3 = vector.load %arg3[%c0_3, %c0_4] : memref<128x256xf32, #tpu.memory_space<vmem>>, vector<128x256xf32>
    %cst_5 = arith.constant dense<0.000000e+00> : vector<32x128xf32>
    %4 = tpu.matmul %0, %3, %cst_5 {dimension_numbers = #tpu.dot_dimension_numbers<[1], [1], [0], [0], [0, 0, 1, 0], [], []>} : vector<32x256xf32>, vector<128x256xf32>, vector<32x128xf32> -> vector<32x128xf32>
    %c0_6 = arith.constant 0 : index
    %c0_7 = arith.constant 0 : index
    %5 = vector.load %arg4[%c0_6, %c0_7] : memref<128x256xf32, #tpu.memory_space<vmem>>, vector<128x256xf32>
    %cst_8 = arith.constant dense<0.000000e+00> : vector<32x128xf32>
    %6 = tpu.matmul %0, %5, %cst_8 {dimension_numbers = #tpu.dot_dimension_numbers<[1], [1], [0], [0], [0, 0, 1, 0], [], []>} : vector<32x256xf32>, vector<128x256xf32>, vector<32x128xf32> -> vector<32x128xf32>
    %c0_9 = arith.constant 0 : index
    %c0_10 = arith.constant 0 : index
    %7 = vector.load %arg5[%c0_9, %c0_10] : memref<32x256xf32, #tpu.memory_space<vmem>>, vector<32x256xf32>
    %c0_11 = arith.constant 0 : index
    %c0_12 = arith.constant 0 : index
    %8 = vector.load %arg6[%c0_11, %c0_12] : memref<32x256xf32, #tpu.memory_space<vmem>>, vector<32x256xf32>
    %9 = arith.mulf %2, %7 : vector<32x256xf32>
    %c1_i32 = arith.constant 1 : i32
    %10 = tpu.dynamic_rotate %2 by %c1_i32 dim 1 : vector<32x256xf32>, i32 -> vector<32x256xf32>
    %c255_i32 = arith.constant 255 : i32
    %11 = tpu.dynamic_rotate %2 by %c255_i32 dim 1 : vector<32x256xf32>, i32 -> vector<32x256xf32>
    %12 = tpu.iota {dimensions = array<i32: 1>} : vector<32x256xi32>
    %c2_i32 = arith.constant 2 : i32
    %c0_i32 = arith.constant 0 : i32
    %13 = arith.cmpi eq, %c2_i32, %c0_i32 : i32
    %c1_i32_13 = arith.constant 1 : i32
    %14 = arith.select %13, %c1_i32_13, %c2_i32 : i32
    %15 = vector.broadcast %14 : i32 to vector<32x256xi32>
    %16 = arith.remsi %12, %15 : vector<32x256xi32>
    %c0_i32_14 = arith.constant 0 : i32
    %17 = vector.broadcast %c0_i32_14 : i32 to vector<32x256xi32>
    %18 = arith.cmpi ne, %16, %17 : vector<32x256xi32>
    %c0_i32_15 = arith.constant 0 : i32
    %19 = vector.broadcast %c0_i32_15 : i32 to vector<32x256xi32>
    %20 = arith.cmpi slt, %16, %19 : vector<32x256xi32>
    %c0_i32_16 = arith.constant 0 : i32
    %21 = arith.cmpi slt, %14, %c0_i32_16 : i32
    %22 = vector.broadcast %21 : i1 to vector<32x256xi1>
    %23 = vector.broadcast %22 : vector<32x256xi1> to vector<32x256xi1>
    %24 = arith.xori %20, %23 : vector<32x256xi1>
    %25 = arith.andi %24, %18 : vector<32x256xi1>
    %26 = vector.broadcast %14 : i32 to vector<32x256xi32>
    %27 = arith.addi %16, %26 : vector<32x256xi32>
    %28 = arith.select %25, %27, %16 : vector<32x256xi1>, vector<32x256xi32>
    %c0_i32_17 = arith.constant 0 : i32
    %29 = vector.broadcast %c0_i32_17 : i32 to vector<32x256xi32>
    %30 = arith.cmpi eq, %28, %29 : vector<32x256xi32>
    %cst_18 = arith.constant 0.000000e+00 : f32
    %31 = vector.broadcast %cst_18 : f32 to vector<32x256xf32>
    %32 = arith.subf %31, %11 : vector<32x256xf32>
    %33 = arith.select %30, %32, %10 : vector<32x256xi1>, vector<32x256xf32>
    %34 = arith.mulf %33, %8 : vector<32x256xf32>
    %35 = arith.addf %9, %34 : vector<32x256xf32>
    %36 = vector.extract_strided_slice %7 {offsets = [0, 0], sizes = [32, 128], strides = [1, 1]} : vector<32x256xf32> to vector<32x128xf32>
    %37 = arith.mulf %4, %36 : vector<32x128xf32>
    %c1_i32_19 = arith.constant 1 : i32
    %38 = tpu.dynamic_rotate %4 by %c1_i32_19 dim 1 : vector<32x128xf32>, i32 -> vector<32x128xf32>
    %c127_i32 = arith.constant 127 : i32
    %39 = tpu.dynamic_rotate %4 by %c127_i32 dim 1 : vector<32x128xf32>, i32 -> vector<32x128xf32>
    %40 = tpu.iota {dimensions = array<i32: 1>} : vector<32x128xi32>
    %c2_i32_20 = arith.constant 2 : i32
    %c0_i32_21 = arith.constant 0 : i32
    %41 = arith.cmpi eq, %c2_i32_20, %c0_i32_21 : i32
    %c1_i32_22 = arith.constant 1 : i32
    %42 = arith.select %41, %c1_i32_22, %c2_i32_20 : i32
    %43 = vector.broadcast %42 : i32 to vector<32x128xi32>
    %44 = arith.remsi %40, %43 : vector<32x128xi32>
    %c0_i32_23 = arith.constant 0 : i32
    %45 = vector.broadcast %c0_i32_23 : i32 to vector<32x128xi32>
    %46 = arith.cmpi ne, %44, %45 : vector<32x128xi32>
    %c0_i32_24 = arith.constant 0 : i32
    %47 = vector.broadcast %c0_i32_24 : i32 to vector<32x128xi32>
    %48 = arith.cmpi slt, %44, %47 : vector<32x128xi32>
    %c0_i32_25 = arith.constant 0 : i32
    %49 = arith.cmpi slt, %42, %c0_i32_25 : i32
    %50 = vector.broadcast %49 : i1 to vector<32x128xi1>
    %51 = vector.broadcast %50 : vector<32x128xi1> to vector<32x128xi1>
    %52 = arith.xori %48, %51 : vector<32x128xi1>
    %53 = arith.andi %52, %46 : vector<32x128xi1>
    %54 = vector.broadcast %42 : i32 to vector<32x128xi32>
    %55 = arith.addi %44, %54 : vector<32x128xi32>
    %56 = arith.select %53, %55, %44 : vector<32x128xi1>, vector<32x128xi32>
    %c0_i32_26 = arith.constant 0 : i32
    %57 = vector.broadcast %c0_i32_26 : i32 to vector<32x128xi32>
    %58 = arith.cmpi eq, %56, %57 : vector<32x128xi32>
    %cst_27 = arith.constant 0.000000e+00 : f32
    %59 = vector.broadcast %cst_27 : f32 to vector<32x128xf32>
    %60 = arith.subf %59, %39 : vector<32x128xf32>
    %61 = arith.select %58, %60, %38 : vector<32x128xi1>, vector<32x128xf32>
    %62 = vector.extract_strided_slice %8 {offsets = [0, 0], sizes = [32, 128], strides = [1, 1]} : vector<32x256xf32> to vector<32x128xf32>
    %63 = arith.mulf %61, %62 : vector<32x128xf32>
    %64 = arith.addf %37, %63 : vector<32x128xf32>
    %c0_28 = arith.constant 0 : index
    %c0_29 = arith.constant 0 : index
    %65 = vector.load %arg7[%c0_28, %c0_29] : memref<32x256xf32, #tpu.memory_space<vmem>>, vector<32x256xf32>
    tpu.vector_store %arg7[%c0_28, %c0_29], %35 {strides = array<i32>} : memref<32x256xf32, #tpu.memory_space<vmem>>, vector<32x256xf32>,
    %c0_30 = arith.constant 0 : index
    %c0_31 = arith.constant 0 : index
    %66 = vector.load %arg8[%c0_30, %c0_31] : memref<32x128xf32, #tpu.memory_space<vmem>>, vector<32x128xf32>
    tpu.vector_store %arg8[%c0_30, %c0_31], %64 {strides = array<i32>} : memref<32x128xf32, #tpu.memory_space<vmem>>, vector<32x128xf32>,
    %c0_32 = arith.constant 0 : index
    %c0_33 = arith.constant 0 : index
    %67 = vector.load %arg9[%c0_32, %c0_33] : memref<32x128xf32, #tpu.memory_space<vmem>>, vector<32x128xf32>
    tpu.vector_store %arg9[%c0_32, %c0_33], %6 {strides = array<i32>} : memref<32x128xf32, #tpu.memory_space<vmem>>, vector<32x128xf32>,
    return
  }
  func.func @transform_0(%arg0: i32) -> (i32, i32) {
    %c0_i32 = arith.constant 0 : i32
    %c0_i32_0 = arith.constant 0 : i32
    return %arg0, %c0_i32 : i32, i32
  }
  func.func @transform_1(%arg0: i32) -> (i32, i32) {
    %c0_i32 = arith.constant 0 : i32
    %c0_i32_0 = arith.constant 0 : i32
    %c0_i32_1 = arith.constant 0 : i32
    return %c0_i32, %c0_i32_0 : i32, i32
  }
  func.func @transform_2(%arg0: i32) -> (i32, i32) {
    %c0_i32 = arith.constant 0 : i32
    %c0_i32_0 = arith.constant 0 : i32
    %c0_i32_1 = arith.constant 0 : i32
    return %c0_i32, %c0_i32_0 : i32, i32
  }
  func.func @transform_3(%arg0: i32) -> (i32, i32) {
    %c0_i32 = arith.constant 0 : i32
    %c0_i32_0 = arith.constant 0 : i32
    %c0_i32_1 = arith.constant 0 : i32
    return %c0_i32, %c0_i32_0 : i32, i32
  }
  func.func @transform_4(%arg0: i32) -> (i32, i32) {
    %c0_i32 = arith.constant 0 : i32
    %c0_i32_0 = arith.constant 0 : i32
    return %arg0, %c0_i32 : i32, i32
  }
  func.func @transform_5(%arg0: i32) -> (i32, i32) {
    %c0_i32 = arith.constant 0 : i32
    %c0_i32_0 = arith.constant 0 : i32
    return %arg0, %c0_i32 : i32, i32
  }
  func.func @transform_6(%arg0: i32) -> (i32, i32) {
    %c0_i32 = arith.constant 0 : i32
    %c0_i32_0 = arith.constant 0 : i32
    return %arg0, %c0_i32 : i32, i32
  }
  func.func @transform_7(%arg0: i32) -> (i32, i32) {
    %c0_i32 = arith.constant 0 : i32
    %c0_i32_0 = arith.constant 0 : i32
    return %arg0, %c0_i32 : i32, i32
  }
  func.func @transform_8(%arg0: i32) -> (i32, i32) {
    %c0_i32 = arith.constant 0 : i32
    %c0_i32_0 = arith.constant 0 : i32
    return %arg0, %c0_i32 : i32, i32
  }
}

</mosaic_0001>

<llo_original>
// kernel: tpu_custom_call.1
$region0: #{tpu_custom_call.1}
  #allocation0 [shape = 'u32[]', space=smem, size = 0x4, offset = 0x4, fixed_abs, tag = 'smem constant byte address 0x4 - core index']
  #allocation1 [shape = 'u32[144,128]{1,0:T(1,128)}', space=vmem, size = 0x12000, scoped, tag = 'internal scratch']
  %s0 = inlined_call_operand.hbm [shape: f32[32,256], index: 0, kind: input, shape index: {}]
  %s1 = inlined_call_operand.hbm [shape: f32[256,256], index: 1, kind: input, shape index: {}]
  %s2 = inlined_call_operand.hbm [shape: f32[128,256], index: 2, kind: input, shape index: {}]
  %s3 = inlined_call_operand.hbm [shape: f32[128,256], index: 3, kind: input, shape index: {}]
  %s4 = inlined_call_operand.hbm [shape: f32[32,256], index: 4, kind: input, shape index: {}]
  %s5 = inlined_call_operand.hbm [shape: f32[32,256], index: 5, kind: input, shape index: {}]
  %s6 = inlined_call_operand.hbm [shape: f32[32,256], index: 6, kind: output, shape index: {0}]
  %s7 = inlined_call_operand.hbm [shape: f32[32,128], index: 7, kind: output, shape index: {1}]
  %s8 = inlined_call_operand.hbm [shape: f32[32,128], index: 8, kind: output, shape index: {2}]
  %9 = xla_tuple %s6, %s7, %s8
  %s10 = sld [smem:[#allocation0]]
  $region74: #{tpu_custom_call.1} parent=0
    _
  %s12 = ssub.s32 1, %s10
  %s13 = scalar_select 0, %s12, %s10
  $region1: #{tpu_custom_call.1} parent=0
    #allocation2 [shape = 'u8[32768]{0}', space=vmem, size = 0x8000, scoped, tag = 'input window, operand 0, single buffered']
    #allocation3 [shape = 's32[1]{0}', space=sflag, size = 0x4, scoped, tag = 'scoped memory for tpu_custom_call.1']
    #allocation4 [shape = 's32[1]{0}', space=sflag, size = 0x4, scoped, tag = 'scoped memory for tpu_custom_call.1']
    #allocation5 [shape = 'u8[262144]{0}', space=vmem, size = 0x40000, scoped, tag = 'input window, operand 1, single buffered']
    #allocation6 [shape = 's32[1]{0}', space=sflag, size = 0x4, scoped, tag = 'scoped memory for tpu_custom_call.1']
    #allocation7 [shape = 'u8[131072]{0}', space=vmem, size = 0x20000, scoped, tag = 'input window, operand 2, single buffered']
    #allocation8 [shape = 'u8[131072]{0}', space=vmem, size = 0x20000, scoped, tag = 'input window, operand 3, single buffered']
    #allocation9 [shape = 's32[1]{0}', space=sflag, size = 0x4, scoped, tag = 'scoped memory for tpu_custom_call.1']
    #allocation10 [shape = 'u8[32768]{0}', space=vmem, size = 0x8000, scoped, tag = 'input window, operand 4, single buffered']
    #allocation11 [shape = 'u8[32768]{0}', space=vmem, size = 0x8000, scoped, tag = 'input window, operand 5, single buffered']
    #allocation12 [shape = 's32[1]{0}', space=sflag, size = 0x4, scoped, tag = 'scoped memory for tpu_custom_call.1']
    #allocation13 [shape = 'u8[32768]{0}', space=vmem, size = 0x8000, scoped, tag = 'output window, operand 0, single buffered']
    #allocation14 [shape = 'u8[16384]{0}', space=vmem, size = 0x4000, scoped, tag = 'output window, operand 1, single buffered']
    #allocation15 [shape = 's32[1]{0}', space=sflag, size = 0x4, scoped, tag = 'scoped memory for tpu_custom_call.1']
    #allocation16 [shape = 'u8[16384]{0}', space=vmem, size = 0x4000, scoped, tag = 'output window, operand 2, single buffered']
    %14 = vsyncpa [#allocation3], 0
    %15 = vsyncpa [#allocation6], 0
    %16 = vsyncpa [#allocation9], 0
    %17 = vsyncpa [#allocation12], 0
    %18 = vsyncpa [#allocation4], 0
    %19 = vsyncpa [#allocation15], 0
    // Predicated region
    $region2: #{tpu_custom_call.1} parent=1 // pred_check
      _
    $region3: #{tpu_custom_call.1} parent=1 // pred_check_branch
      %21 = sbr.rel (0) target = $region5
    $region4: #{tpu_custom_call.1} parent=1 // pred_region
      %s23 = ssub.s32 1024, 1024
      %24 = vsyncadd [#allocation3], %s23
      %s25 = sshll.u32 [#allocation2], 4
      %s26 = int_to_ptr.vmem [resolvable:$true] %s25
      %31 = dma.hbm_to_vmem [thread:$0]  %s0, 1024, %s26, [#allocation3], 256, 256, 16
    $region5: #{tpu_custom_call.1} parent=1 // pred_fallthru
      _
    // Predicated region
    $region6: #{tpu_custom_call.1} parent=1 // pred_check
      _
    $region7: #{tpu_custom_call.1} parent=1 // pred_check_branch
      %33 = sbr.rel (0) target = $region9
    $region8: #{tpu_custom_call.1} parent=1 // pred_region
      %s35 = ssub.s32 8192, 8192
      %36 = vsyncadd [#allocation6], %s35
      %s37 = sshll.u32 [#allocation5], 4
      %s38 = int_to_ptr.vmem [resolvable:$true] %s37
      %43 = dma.hbm_to_vmem [thread:$0]  %s1, 8192, %s38, [#allocation6], 256, 256, 16
    $region9: #{tpu_custom_call.1} parent=1 // pred_fallthru
      _
    // Predicated region
    $region10: #{tpu_custom_call.1} parent=1 // pred_check
      _
    $region11: #{tpu_custom_call.1} parent=1 // pred_check_branch
      %45 = sbr.rel (0) target = $region13
    $region12: #{tpu_custom_call.1} parent=1 // pred_region
      %s47 = ssub.s32 4096, 4096
      %48 = vsyncadd [#allocation6], %s47
      %s49 = sshll.u32 [#allocation7], 4
      %s50 = int_to_ptr.vmem [resolvable:$true] %s49
      %55 = dma.hbm_to_vmem [thread:$0]  %s2, 4096, %s50, [#allocation6], 256, 256, 16
    $region13: #{tpu_custom_call.1} parent=1 // pred_fallthru
      _
    // Predicated region
    $region14: #{tpu_custom_call.1} parent=1 // pred_check
      _
    $region15: #{tpu_custom_call.1} parent=1 // pred_check_branch
      %57 = sbr.rel (0) target = $region17
    $region16: #{tpu_custom_call.1} parent=1 // pred_region
      %s59 = ssub.s32 4096, 4096
      %60 = vsyncadd [#allocation9], %s59
      %s61 = sshll.u32 [#allocation8], 4
      %s62 = int_to_ptr.vmem [resolvable:$true] %s61
      %67 = dma.hbm_to_vmem [thread:$0]  %s3, 4096, %s62, [#allocation9], 256, 256, 16
    $region17: #{tpu_custom_call.1} parent=1 // pred_fallthru
      _
    // Predicated region
    $region18: #{tpu_custom_call.1} parent=1 // pred_check
      _
    $region19: #{tpu_custom_call.1} parent=1 // pred_check_branch
      %69 = sbr.rel (0) target = $region21
    $region20: #{tpu_custom_call.1} parent=1 // pred_region
      %s71 = ssub.s32 1024, 1024
      %72 = vsyncadd [#allocation9], %s71
      %s73 = sshll.u32 [#allocation10], 4
      %s74 = int_to_ptr.vmem [resolvable:$true] %s73
      %79 = dma.hbm_to_vmem [thread:$0]  %s4, 1024, %s74, [#allocation9], 256, 256, 16
    $region21: #{tpu_custom_call.1} parent=1 // pred_fallthru
      _
    // Predicated region
    $region22: #{tpu_custom_call.1} parent=1 // pred_check
      _
    $region23: #{tpu_custom_call.1} parent=1 // pred_check_branch
      %81 = sbr.rel (0) target = $region25
    $region24: #{tpu_custom_call.1} parent=1 // pred_region
      %s83 = ssub.s32 1024, 1024
      %84 = vsyncadd [#allocation12], %s83
      %s85 = sshll.u32 [#allocation11], 4
      %s86 = int_to_ptr.vmem [resolvable:$true] %s85
      %91 = dma.hbm_to_vmem [thread:$0]  %s5, 1024, %s86, [#allocation12], 256, 256, 16
    $region25: #{tpu_custom_call.1} parent=1 // pred_fallthru
      _
    // Predicated region
    $region26: #{tpu_custom_call.1} parent=1 // pred_check
      _
    $region27: #{tpu_custom_call.1} parent=1 // pred_check_branch
      %93 = sbr.rel (0) target = $region29
    $region28: #{tpu_custom_call.1} parent=1 // pred_region
      %94 = dma.done [#allocation3], 1024
    $region29: #{tpu_custom_call.1} parent=1 // pred_fallthru
      _
    // Predicated region
    $region30: #{tpu_custom_call.1} parent=1 // pred_check
      _
    $region31: #{tpu_custom_call.1} parent=1 // pred_check_branch
      %96 = sbr.rel (0) target = $region33
    $region32: #{tpu_custom_call.1} parent=1 // pred_region
      %97 = dma.done [#allocation6], 8192
    $region33: #{tpu_custom_call.1} parent=1 // pred_fallthru
      _
    // Predicated region
    $region34: #{tpu_custom_call.1} parent=1 // pred_check
      _
    $region35: #{tpu_custom_call.1} parent=1 // pred_check_branch
      %99 = sbr.rel (0) target = $region37
    $region36: #{tpu_custom_call.1} parent=1 // pred_region
      %100 = dma.done [#allocation6], 4096
    $region37: #{tpu_custom_call.1} parent=1 // pred_fallthru
      _
    // Predicated region
    $region38: #{tpu_custom_call.1} parent=1 // pred_check
      _
    $region39: #{tpu_custom_call.1} parent=1 // pred_check_branch
      %102 = sbr.rel (0) target = $region41
    $region40: #{tpu_custom_call.1} parent=1 // pred_region
      %103 = dma.done [#allocation9], 4096
    $region41: #{tpu_custom_call.1} parent=1 // pred_fallthru
      _
    // Predicated region
    $region42: #{tpu_custom_call.1} parent=1 // pred_check
      _
    $region43: #{tpu_custom_call.1} parent=1 // pred_check_branch
      %105 = sbr.rel (0) target = $region45
    $region44: #{tpu_custom_call.1} parent=1 // pred_region
      %106 = dma.done [#allocation9], 1024
    $region45: #{tpu_custom_call.1} parent=1 // pred_fallthru
      _
    // Predicated region
    $region46: #{tpu_custom_call.1} parent=1 // pred_check
      _
    $region47: #{tpu_custom_call.1} parent=1 // pred_check_branch
      %108 = sbr.rel (0) target = $region49
    $region48: #{tpu_custom_call.1} parent=1 // pred_region
      %109 = dma.done [#allocation12], 1024
    $region49: #{tpu_custom_call.1} parent=1 // pred_fallthru
      _
    %v110 = vld [vmem:[#allocation2] sm:$0xff]
    %v111 = vld [vmem:[#allocation2 + $0x8] sm:$0xff]
    %v112 = vld [vmem:[#allocation2 + $0x10] sm:$0xff]
    %v113 = vld [vmem:[#allocation2 + $0x18] sm:$0xff]
    %v114 = vld [vmem:[#allocation2 + $0x20] sm:$0xff]
    %v115 = vld [vmem:[#allocation2 + $0x28] sm:$0xff]
    %v116 = vld [vmem:[#allocation2 + $0x30] sm:$0xff]
    %v117 = vld [vmem:[#allocation2 + $0x38] sm:$0xff]
    %v118 = vld [vmem:[#allocation5] sm:$0xff]
    %v119 = vld [vmem:[#allocation5 + $0x8] sm:$0xff]
    %v120 = vld [vmem:[#allocation5 + $0x10] sm:$0xff]
    %v121 = vld [vmem:[#allocation5 + $0x18] sm:$0xff]
    %v122 = vld [vmem:[#allocation5 + $0x20] sm:$0xff]
    %v123 = vld [vmem:[#allocation5 + $0x28] sm:$0xff]
    %v124 = vld [vmem:[#allocation5 + $0x30] sm:$0xff]
    %v125 = vld [vmem:[#allocation5 + $0x38] sm:$0xff]
    %v126 = vld [vmem:[#allocation5 + $0x40] sm:$0xff]
    %v127 = vld [vmem:[#allocation5 + $0x48] sm:$0xff]
    %v128 = vld [vmem:[#allocation5 + $0x50] sm:$0xff]
    %v129 = vld [vmem:[#allocation5 + $0x58] sm:$0xff]
    %v130 = vld [vmem:[#allocation5 + $0x60] sm:$0xff]
    %v131 = vld [vmem:[#allocation5 + $0x68] sm:$0xff]
    %v132 = vld [vmem:[#allocation5 + $0x70] sm:$0xff]
    %v133 = vld [vmem:[#allocation5 + $0x78] sm:$0xff]
    %v134 = vld [vmem:[#allocation5 + $0x80] sm:$0xff]
    %v135 = vld [vmem:[#allocation5 + $0x88] sm:$0xff]
    %v136 = vld [vmem:[#allocation5 + $0x90] sm:$0xff]
    %v137 = vld [vmem:[#allocation5 + $0x98] sm:$0xff]
    %v138 = vld [vmem:[#allocation5 + $0xa0] sm:$0xff]
    %v139 = vld [vmem:[#allocation5 + $0xa8] sm:$0xff]
    %v140 = vld [vmem:[#allocation5 + $0xb0] sm:$0xff]
    %v141 = vld [vmem:[#allocation5 + $0xb8] sm:$0xff]
    %v142 = vld [vmem:[#allocation5 + $0xc0] sm:$0xff]
    %v143 = vld [vmem:[#allocation5 + $0xc8] sm:$0xff]
    %v144 = vld [vmem:[#allocation5 + $0xd0] sm:$0xff]
    %v145 = vld [vmem:[#allocation5 + $0xd8] sm:$0xff]
    %v146 = vld [vmem:[#allocation5 + $0xe0] sm:$0xff]
    %v147 = vld [vmem:[#allocation5 + $0xe8] sm:$0xff]
    %v148 = vld [vmem:[#allocation5 + $0xf0] sm:$0xff]
    %v149 = vld [vmem:[#allocation5 + $0xf8] sm:$0xff]
    %v150 = vld [vmem:[#allocation5 + $0x100] sm:$0xff]
    %v151 = vld [vmem:[#allocation5 + $0x108] sm:$0xff]
    %v152 = vld [vmem:[#allocation5 + $0x110] sm:$0xff]
    %v153 = vld [vmem:[#allocation5 + $0x118] sm:$0xff]
    %v154 = vld [vmem:[#allocation5 + $0x120] sm:$0xff]
    %v155 = vld [vmem:[#allocation5 + $0x128] sm:$0xff]
    %v156 = vld [vmem:[#allocation5 + $0x130] sm:$0xff]
    %v157 = vld [vmem:[#allocation5 + $0x138] sm:$0xff]
    %v158 = vld [vmem:[#allocation5 + $0x140] sm:$0xff]
    %v159 = vld [vmem:[#allocation5 + $0x148] sm:$0xff]
    %v160 = vld [vmem:[#allocation5 + $0x150] sm:$0xff]
    %v161 = vld [vmem:[#allocation5 + $0x158] sm:$0xff]
    %v162 = vld [vmem:[#allocation5 + $0x160] sm:$0xff]
    %v163 = vld [vmem:[#allocation5 + $0x168] sm:$0xff]
    %v164 = vld [vmem:[#allocation5 + $0x170] sm:$0xff]
    %v165 = vld [vmem:[#allocation5 + $0x178] sm:$0xff]
    %v166 = vld [vmem:[#allocation5 + $0x180] sm:$0xff]
    %v167 = vld [vmem:[#allocation5 + $0x188] sm:$0xff]
    %v168 = vld [vmem:[#allocation5 + $0x190] sm:$0xff]
    %v169 = vld [vmem:[#allocation5 + $0x198] sm:$0xff]
    %v170 = vld [vmem:[#allocation5 + $0x1a0] sm:$0xff]
    %v171 = vld [vmem:[#allocation5 + $0x1a8] sm:$0xff]
    %v172 = vld [vmem:[#allocation5 + $0x1b0] sm:$0xff]
    %v173 = vld [vmem:[#allocation5 + $0x1b8] sm:$0xff]
    %v174 = vld [vmem:[#allocation5 + $0x1c0] sm:$0xff]
    %v175 = vld [vmem:[#allocation5 + $0x1c8] sm:$0xff]
    %v176 = vld [vmem:[#allocation5 + $0x1d0] sm:$0xff]
    %v177 = vld [vmem:[#allocation5 + $0x1d8] sm:$0xff]
    %v178 = vld [vmem:[#allocation5 + $0x1e0] sm:$0xff]
    %v179 = vld [vmem:[#allocation5 + $0x1e8] sm:$0xff]
    %v180 = vld [vmem:[#allocation5 + $0x1f0] sm:$0xff]
    %v181 = vld [vmem:[#allocation5 + $0x1f8] sm:$0xff]
    %182 = vmatprep.subr.mxu0 %v119
    %183 = vmatpush1.xpose.msra.mxu0 %v118
    %184 = vmatprep.subr.mxu0 %v121
    %185 = vmatpush1.xpose.msra.mxu0 %v120
    %186 = vmatprep.subr.mxu0 %v123
    %187 = vmatpush1.xpose.msra.mxu0 %v122
    %188 = vmatprep.subr.mxu0 %v125
    %189 = vmatpush1.xpose.msra.mxu0 %v124
    %190 = vmatprep.subr.mxu0 %v127
    %191 = vmatpush1.xpose.msra.mxu0 %v126
    %192 = vmatprep.subr.mxu0 %v129
    %193 = vmatpush1.xpose.msra.mxu0 %v128
    %194 = vmatprep.subr.mxu0 %v131
    %195 = vmatpush1.xpose.msra.mxu0 %v130
    %196 = vmatprep.subr.mxu0 %v133
    %197 = vmatpush1.xpose.msra.mxu0 %v132
    %198 = vmatprep.subr.mxu0 %v135
    %199 = vmatpush1.xpose.msra.mxu0 %v134
    %200 = vmatprep.subr.mxu0 %v137
    %201 = vmatpush1.xpose.msra.mxu0 %v136
    %202 = vmatprep.subr.mxu0 %v139
    %203 = vmatpush1.xpose.msra.mxu0 %v138
    %204 = vmatprep.subr.mxu0 %v141
    %205 = vmatpush1.xpose.msra.mxu0 %v140
    %206 = vmatprep.subr.mxu0 %v143
    %207 = vmatpush1.xpose.msra.mxu0 %v142
    %208 = vmatprep.subr.mxu0 %v145
    %209 = vmatpush1.xpose.msra.mxu0 %v144
    %210 = vmatprep.subr.mxu0 %v147
    %211 = vmatpush1.xpose.msra.mxu0 %v146
    %212 = vmatprep.subr.mxu0 %v149
    %213 = vmatpush1.xpose.msra.mxu0 %v148
    %214 = vmatprep.subr.mxu0 %v151
    %215 = vmatpush1.xpose.msra.mxu0 %v150
    %216 = vmatprep.subr.mxu0 %v153
    %217 = vmatpush1.xpose.msra.mxu0 %v152
    %218 = vmatprep.subr.mxu0 %v155
    %219 = vmatpush1.xpose.msra.mxu0 %v154
    %220 = vmatprep.subr.mxu0 %v157
    %221 = vmatpush1.xpose.msra.mxu0 %v156
    %222 = vmatprep.subr.mxu0 %v159
    %223 = vmatpush1.xpose.msra.mxu0 %v158
    %224 = vmatprep.subr.mxu0 %v161
    %225 = vmatpush1.xpose.msra.mxu0 %v160
    %226 = vmatprep.subr.mxu0 %v163
    %227 = vmatpush1.xpose.msra.mxu0 %v162
    %228 = vmatprep.subr.mxu0 %v165
    %229 = vmatpush1.xpose.msra.mxu0 %v164
    %230 = vmatprep.subr.mxu0 %v167
    %231 = vmatpush1.xpose.msra.mxu0 %v166
    %232 = vmatprep.subr.mxu0 %v169
    %233 = vmatpush1.xpose.msra.mxu0 %v168
    %234 = vmatprep.subr.mxu0 %v171
    %235 = vmatpush1.xpose.msra.mxu0 %v170
    %236 = vmatprep.subr.mxu0 %v173
    %237 = vmatpush1.xpose.msra.mxu0 %v172
    %238 = vmatprep.subr.mxu0 %v175
    %239 = vmatpush1.xpose.msra.mxu0 %v174
    %240 = vmatprep.subr.mxu0 %v177
    %241 = vmatpush1.xpose.msra.mxu0 %v176
    %242 = vmatprep.subr.mxu0 %v179
    %243 = vmatpush1.xpose.msra.mxu0 %v178
    %244 = vmatprep.subr.mxu0 %v181
    %245 = vmatpush1.xpose.msra.mxu0 %v180
    %246 = vmatprep.mubr.f32.mxu0 %v111
    %247 = vmatmul.mubr.f32.gmra.mrb[0].mxu0 %v110
    %v248 = vpop.f32.mrb[0].mxu0
    %v249 = vadd.f32 0.0, %v248
    %v250 = vpop.f32.mrb[0].mxu0
    %v251 = vadd.f32 0.0, %v250
    %252 = vmatprep.mubr.f32.mxu0 %v113
    %253 = vmatmul.mubr.f32.gmra.mrb[0].mxu0 %v112
    %v254 = vpop.f32.mrb[0].mxu0
    %v255 = vadd.f32 0.0, %v254
    %v256 = vpop.f32.mrb[0].mxu0
    %v257 = vadd.f32 0.0, %v256
    %258 = vmatprep.mubr.f32.mxu0 %v115
    %259 = vmatmul.mubr.f32.gmra.mrb[0].mxu0 %v114
    %v260 = vpop.f32.mrb[0].mxu0
    %v261 = vadd.f32 0.0, %v260
    %v262 = vpop.f32.mrb[0].mxu0
    %v263 = vadd.f32 0.0, %v262
    %264 = vmatprep.mubr.f32.mxu0 %v117
    %265 = vmatmul.mubr.f32.gmra.mrb[0].mxu0 %v116
    %v266 = vpop.f32.mrb[0].mxu0
    %v267 = vadd.f32 0.0, %v266
    %v268 = vpop.f32.mrb[0].mxu0
    %v269 = vadd.f32 0.0, %v268
    %270 = vdwg.mxu0
    %v271 = vld [vmem:[#allocation7] sm:$0xff]
    %v272 = vld [vmem:[#allocation7 + $0x8] sm:$0xff]
    %v273 = vld [vmem:[#allocation7 + $0x10] sm:$0xff]
    %v274 = vld [vmem:[#allocation7 + $0x18] sm:$0xff]
    %v275 = vld [vmem:[#allocation7 + $0x20] sm:$0xff]
    %v276 = vld [vmem:[#allocation7 + $0x28] sm:$0xff]
    %v277 = vld [vmem:[#allocation7 + $0x30] sm:$0xff]
    %v278 = vld [vmem:[#allocation7 + $0x38] sm:$0xff]
    %v279 = vld [vmem:[#allocation7 + $0x40] sm:$0xff]
    %v280 = vld [vmem:[#allocation7 + $0x48] sm:$0xff]
    %v281 = vld [vmem:[#allocation7 + $0x50] sm:$0xff]
    %v282 = vld [vmem:[#allocation7 + $0x58] sm:$0xff]
    %v283 = vld [vmem:[#allocation7 + $0x60] sm:$0xff]
    %v284 = vld [vmem:[#allocation7 + $0x68] sm:$0xff]
    %v285 = vld [vmem:[#allocation7 + $0x70] sm:$0xff]
    %v286 = vld [vmem:[#allocation7 + $0x78] sm:$0xff]
    %v287 = vld [vmem:[#allocation7 + $0x80] sm:$0xff]
    %v288 = vld [vmem:[#allocation7 + $0x88] sm:$0xff]
    %v289 = vld [vmem:[#allocation7 + $0x90] sm:$0xff]
    %v290 = vld [vmem:[#allocation7 + $0x98] sm:$0xff]
    %v291 = vld [vmem:[#allocation7 + $0xa0] sm:$0xff]
    %v292 = vld [vmem:[#allocation7 + $0xa8] sm:$0xff]
    %v293 = vld [vmem:[#allocation7 + $0xb0] sm:$0xff]
    %v294 = vld [vmem:[#allocation7 + $0xb8] sm:$0xff]
    %v295 = vld [vmem:[#allocation7 + $0xc0] sm:$0xff]
    %v296 = vld [vmem:[#allocation7 + $0xc8] sm:$0xff]
    %v297 = vld [vmem:[#allocation7 + $0xd0] sm:$0xff]
    %v298 = vld [vmem:[#allocation7 + $0xd8] sm:$0xff]
    %v299 = vld [vmem:[#allocation7 + $0xe0] sm:$0xff]
    %v300 = vld [vmem:[#allocation7 + $0xe8] sm:$0xff]
    %v301 = vld [vmem:[#allocation7 + $0xf0] sm:$0xff]
    %v302 = vld [vmem:[#allocation7 + $0xf8] sm:$0xff]
    %303 = vmatprep.subr.mxu0 %v272
    %304 = vmatpush1.xpose.msra.mxu0 %v271
    %305 = vmatprep.subr.mxu0 %v274
    %306 = vmatpush1.xpose.msra.mxu0 %v273
    %307 = vmatprep.subr.mxu0 %v276
    %308 = vmatpush1.xpose.msra.mxu0 %v275
    %309 = vmatprep.subr.mxu0 %v278
    %310 = vmatpush1.xpose.msra.mxu0 %v277
    %311 = vmatprep.subr.mxu0 %v280
    %312 = vmatpush1.xpose.msra.mxu0 %v279
    %313 = vmatprep.subr.mxu0 %v282
    %314 = vmatpush1.xpose.msra.mxu0 %v281
    %315 = vmatprep.subr.mxu0 %v284
    %316 = vmatpush1.xpose.msra.mxu0 %v283
    %317 = vmatprep.subr.mxu0 %v286
    %318 = vmatpush1.xpose.msra.mxu0 %v285
    %319 = vmatprep.subr.mxu0 %v288
    %320 = vmatpush1.xpose.msra.mxu0 %v287
    %321 = vmatprep.subr.mxu0 %v290
    %322 = vmatpush1.xpose.msra.mxu0 %v289
    %323 = vmatprep.subr.mxu0 %v292
    %324 = vmatpush1.xpose.msra.mxu0 %v291
    %325 = vmatprep.subr.mxu0 %v294
    %326 = vmatpush1.xpose.msra.mxu0 %v293
    %327 = vmatprep.subr.mxu0 %v296
    %328 = vmatpush1.xpose.msra.mxu0 %v295
    %329 = vmatprep.subr.mxu0 %v298
    %330 = vmatpush1.xpose.msra.mxu0 %v297
    %331 = vmatprep.subr.mxu0 %v300
    %332 = vmatpush1.xpose.msra.mxu0 %v299
    %333 = vmatprep.subr.mxu0 %v302
    %334 = vmatpush1.xpose.msra.mxu0 %v301
    %335 = vmatprep.subr.mxu0 0.0
    %336 = vmatpush1.xpose.msra.mxu0 0.0
    %337 = vmatprep.subr.mxu0 0.0
    %338 = vmatpush1.xpose.msra.mxu0 0.0
    %339 = vmatprep.subr.mxu0 0.0
    %340 = vmatpush1.xpose.msra.mxu0 0.0
    %341 = vmatprep.subr.mxu0 0.0
    %342 = vmatpush1.xpose.msra.mxu0 0.0
    %343 = vmatprep.subr.mxu0 0.0
    %344 = vmatpush1.xpose.msra.mxu0 0.0
    %345 = vmatprep.subr.mxu0 0.0
    %346 = vmatpush1.xpose.msra.mxu0 0.0
    %347 = vmatprep.subr.mxu0 0.0
    %348 = vmatpush1.xpose.msra.mxu0 0.0
    %349 = vmatprep.subr.mxu0 0.0
    %350 = vmatpush1.xpose.msra.mxu0 0.0
    %351 = vmatprep.subr.mxu0 0.0
    %352 = vmatpush1.xpose.msra.mxu0 0.0
    %353 = vmatprep.subr.mxu0 0.0
    %354 = vmatpush1.xpose.msra.mxu0 0.0
    %355 = vmatprep.subr.mxu0 0.0
    %356 = vmatpush1.xpose.msra.mxu0 0.0
    %357 = vmatprep.subr.mxu0 0.0
    %358 = vmatpush1.xpose.msra.mxu0 0.0
    %359 = vmatprep.subr.mxu0 0.0
    %360 = vmatpush1.xpose.msra.mxu0 0.0
    %361 = vmatprep.subr.mxu0 0.0
    %362 = vmatpush1.xpose.msra.mxu0 0.0
    %363 = vmatprep.subr.mxu0 0.0
    %364 = vmatpush1.xpose.msra.mxu0 0.0
    %365 = vmatprep.subr.mxu0 0.0
    %366 = vmatpush1.xpose.msra.mxu0 0.0
    %367 = vmatprep.mubr.f32.mxu0 %v111
    %368 = vmatmul.mubr.f32.gmra.mrb[0].mxu0 %v110
    %v369 = vpop.f32.mrb[0].mxu0
    %v370 = vadd.f32 0.0, %v369
    %v371 = vpop.f32.mrb[0].mxu0
    %372 = vmatprep.mubr.f32.mxu0 %v113
    %373 = vmatmul.mubr.f32.gmra.mrb[0].mxu0 %v112
    %v374 = vpop.f32.mrb[0].mxu0
    %v375 = vadd.f32 0.0, %v374
    %v376 = vpop.f32.mrb[0].mxu0
    %377 = vmatprep.mubr.f32.mxu0 %v115
    %378 = vmatmul.mubr.f32.gmra.mrb[0].mxu0 %v114
    %v379 = vpop.f32.mrb[0].mxu0
    %v380 = vadd.f32 0.0, %v379
    %v381 = vpop.f32.mrb[0].mxu0
    %382 = vmatprep.mubr.f32.mxu0 %v117
    %383 = vmatmul.mubr.f32.gmra.mrb[0].mxu0 %v116
    %v384 = vpop.f32.mrb[0].mxu0
    %v385 = vadd.f32 0.0, %v384
    %v386 = vpop.f32.mrb[0].mxu0
    %387 = vdwg.mxu0
    %v388 = vld [vmem:[#allocation8] sm:$0xff]
    %v389 = vld [vmem:[#allocation8 + $0x8] sm:$0xff]
    %v390 = vld [vmem:[#allocation8 + $0x10] sm:$0xff]
    %v391 = vld [vmem:[#allocation8 + $0x18] sm:$0xff]
    %v392 = vld [vmem:[#allocation8 + $0x20] sm:$0xff]
    %v393 = vld [vmem:[#allocation8 + $0x28] sm:$0xff]
    %v394 = vld [vmem:[#allocation8 + $0x30] sm:$0xff]
    %v395 = vld [vmem:[#allocation8 + $0x38] sm:$0xff]
    %v396 = vld [vmem:[#allocation8 + $0x40] sm:$0xff]
    %v397 = vld [vmem:[#allocation8 + $0x48] sm:$0xff]
    %v398 = vld [vmem:[#allocation8 + $0x50] sm:$0xff]
    %v399 = vld [vmem:[#allocation8 + $0x58] sm:$0xff]
    %v400 = vld [vmem:[#allocation8 + $0x60] sm:$0xff]
    %v401 = vld [vmem:[#allocation8 + $0x68] sm:$0xff]
    %v402 = vld [vmem:[#allocation8 + $0x70] sm:$0xff]
    %v403 = vld [vmem:[#allocation8 + $0x78] sm:$0xff]
    %v404 = vld [vmem:[#allocation8 + $0x80] sm:$0xff]
    %v405 = vld [vmem:[#allocation8 + $0x88] sm:$0xff]
    %v406 = vld [vmem:[#allocation8 + $0x90] sm:$0xff]
    %v407 = vld [vmem:[#allocation8 + $0x98] sm:$0xff]
    %v408 = vld [vmem:[#allocation8 + $0xa0] sm:$0xff]
    %v409 = vld [vmem:[#allocation8 + $0xa8] sm:$0xff]
    %v410 = vld [vmem:[#allocation8 + $0xb0] sm:$0xff]
    %v411 = vld [vmem:[#allocation8 + $0xb8] sm:$0xff]
    %v412 = vld [vmem:[#allocation8 + $0xc0] sm:$0xff]
    %v413 = vld [vmem:[#allocation8 + $0xc8] sm:$0xff]
    %v414 = vld [vmem:[#allocation8 + $0xd0] sm:$0xff]
    %v415 = vld [vmem:[#allocation8 + $0xd8] sm:$0xff]
    %v416 = vld [vmem:[#allocation8 + $0xe0] sm:$0xff]
    %v417 = vld [vmem:[#allocation8 + $0xe8] sm:$0xff]
    %v418 = vld [vmem:[#allocation8 + $0xf0] sm:$0xff]
    %v419 = vld [vmem:[#allocation8 + $0xf8] sm:$0xff]
    %420 = vmatprep.subr.mxu0 %v389
    %421 = vmatpush1.xpose.msra.mxu0 %v388
    %422 = vmatprep.subr.mxu0 %v391
    %423 = vmatpush1.xpose.msra.mxu0 %v390
    %424 = vmatprep.subr.mxu0 %v393
    %425 = vmatpush1.xpose.msra.mxu0 %v392
    %426 = vmatprep.subr.mxu0 %v395
    %427 = vmatpush1.xpose.msra.mxu0 %v394
    %428 = vmatprep.subr.mxu0 %v397
    %429 = vmatpush1.xpose.msra.mxu0 %v396
    %430 = vmatprep.subr.mxu0 %v399
    %431 = vmatpush1.xpose.msra.mxu0 %v398
    %432 = vmatprep.subr.mxu0 %v401
    %433 = vmatpush1.xpose.msra.mxu0 %v400
    %434 = vmatprep.subr.mxu0 %v403
    %435 = vmatpush1.xpose.msra.mxu0 %v402
    %436 = vmatprep.subr.mxu0 %v405
    %437 = vmatpush1.xpose.msra.mxu0 %v404
    %438 = vmatprep.subr.mxu0 %v407
    %439 = vmatpush1.xpose.msra.mxu0 %v406
    %440 = vmatprep.subr.mxu0 %v409
    %441 = vmatpush1.xpose.msra.mxu0 %v408
    %442 = vmatprep.subr.mxu0 %v411
    %443 = vmatpush1.xpose.msra.mxu0 %v410
    %444 = vmatprep.subr.mxu0 %v413
    %445 = vmatpush1.xpose.msra.mxu0 %v412
    %446 = vmatprep.subr.mxu0 %v415
    %447 = vmatpush1.xpose.msra.mxu0 %v414
    %448 = vmatprep.subr.mxu0 %v417
    %449 = vmatpush1.xpose.msra.mxu0 %v416
    %450 = vmatprep.subr.mxu0 %v419
    %451 = vmatpush1.xpose.msra.mxu0 %v418
    %452 = vmatprep.subr.mxu0 0.0
    %453 = vmatpush1.xpose.msra.mxu0 0.0
    %454 = vmatprep.subr.mxu0 0.0
    %455 = vmatpush1.xpose.msra.mxu0 0.0
    %456 = vmatprep.subr.mxu0 0.0
    %457 = vmatpush1.xpose.msra.mxu0 0.0
    %458 = vmatprep.subr.mxu0 0.0
    %459 = vmatpush1.xpose.msra.mxu0 0.0
    %460 = vmatprep.subr.mxu0 0.0
    %461 = vmatpush1.xpose.msra.mxu0 0.0
    %462 = vmatprep.subr.mxu0 0.0
    %463 = vmatpush1.xpose.msra.mxu0 0.0
    %464 = vmatprep.subr.mxu0 0.0
    %465 = vmatpush1.xpose.msra.mxu0 0.0
    %466 = vmatprep.subr.mxu0 0.0
    %467 = vmatpush1.xpose.msra.mxu0 0.0
    %468 = vmatprep.subr.mxu0 0.0
    %469 = vmatpush1.xpose.msra.mxu0 0.0
    %470 = vmatprep.subr.mxu0 0.0
    %471 = vmatpush1.xpose.msra.mxu0 0.0
    %472 = vmatprep.subr.mxu0 0.0
    %473 = vmatpush1.xpose.msra.mxu0 0.0
    %474 = vmatprep.subr.mxu0 0.0
    %475 = vmatpush1.xpose.msra.mxu0 0.0
    %476 = vmatprep.subr.mxu0 0.0
    %477 = vmatpush1.xpose.msra.mxu0 0.0
    %478 = vmatprep.subr.mxu0 0.0
    %479 = vmatpush1.xpose.msra.mxu0 0.0
    %480 = vmatprep.subr.mxu0 0.0
    %481 = vmatpush1.xpose.msra.mxu0 0.0
    %482 = vmatprep.subr.mxu0 0.0
    %483 = vmatpush1.xpose.msra.mxu0 0.0
    %484 = vmatprep.mubr.f32.mxu0 %v111
    %485 = vmatmul.mubr.f32.gmra.mrb[0].mxu0 %v110
    %v486 = vpop.f32.mrb[0].mxu0
    %v487 = vadd.f32 0.0, %v486
    %v488 = vpop.f32.mrb[0].mxu0
    %489 = vmatprep.mubr.f32.mxu0 %v113
    %490 = vmatmul.mubr.f32.gmra.mrb[0].mxu0 %v112
    %v491 = vpop.f32.mrb[0].mxu0
    %v492 = vadd.f32 0.0, %v491
    %v493 = vpop.f32.mrb[0].mxu0
    %494 = vmatprep.mubr.f32.mxu0 %v115
    %495 = vmatmul.mubr.f32.gmra.mrb[0].mxu0 %v114
    %v496 = vpop.f32.mrb[0].mxu0
    %v497 = vadd.f32 0.0, %v496
    %v498 = vpop.f32.mrb[0].mxu0
    %499 = vmatprep.mubr.f32.mxu0 %v117
    %500 = vmatmul.mubr.f32.gmra.mrb[0].mxu0 %v116
    %v501 = vpop.f32.mrb[0].mxu0
    %v502 = vadd.f32 0.0, %v501
    %v503 = vpop.f32.mrb[0].mxu0
    %504 = vdwg.mxu0
    %v505 = vld [vmem:[#allocation10] sm:$0xff]
    %v506 = vld [vmem:[#allocation10 + $0x8] sm:$0xff]
    %v507 = vld [vmem:[#allocation10 + $0x10] sm:$0xff]
    %v508 = vld [vmem:[#allocation10 + $0x18] sm:$0xff]
    %v509 = vld [vmem:[#allocation10 + $0x20] sm:$0xff]
    %v510 = vld [vmem:[#allocation10 + $0x28] sm:$0xff]
    %v511 = vld [vmem:[#allocation10 + $0x30] sm:$0xff]
    %v512 = vld [vmem:[#allocation10 + $0x38] sm:$0xff]
    %v513 = vld [vmem:[#allocation11] sm:$0xff]
    %v514 = vld [vmem:[#allocation11 + $0x8] sm:$0xff]
    %v515 = vld [vmem:[#allocation11 + $0x10] sm:$0xff]
    %v516 = vld [vmem:[#allocation11 + $0x18] sm:$0xff]
    %v517 = vld [vmem:[#allocation11 + $0x20] sm:$0xff]
    %v518 = vld [vmem:[#allocation11 + $0x28] sm:$0xff]
    %v519 = vld [vmem:[#allocation11 + $0x30] sm:$0xff]
    %v520 = vld [vmem:[#allocation11 + $0x38] sm:$0xff]
    %v521 = vmul.f32 %v249, %v505
    %v522 = vmul.f32 %v251, %v506
    %v523 = vmul.f32 %v255, %v507
    %v524 = vmul.f32 %v257, %v508
    %v525 = vmul.f32 %v261, %v509
    %v526 = vmul.f32 %v263, %v510
    %v527 = vmul.f32 %v267, %v511
    %v528 = vmul.f32 %v269, %v512
    %529 = vrot.lane.b32.xlu0 %v249, 1
    %v530 = vpop.permute.xlu0 %529
    %531 = vrot.lane.b32.xlu0 %v255, 1
    %v532 = vpop.permute.xlu0 %531
    %533 = vrot.lane.b32.xlu0 %v261, 1
    %v534 = vpop.permute.xlu0 %533
    %535 = vrot.lane.b32.xlu0 %v267, 1
    %v536 = vpop.permute.xlu0 %535
    %537 = vrot.lane.b32.xlu0 %v251, 1
    %v538 = vpop.permute.xlu0 %537
    %539 = vrot.lane.b32.xlu0 %v257, 1
    %v540 = vpop.permute.xlu0 %539
    %541 = vrot.lane.b32.xlu0 %v263, 1
    %v542 = vpop.permute.xlu0 %541
    %543 = vrot.lane.b32.xlu0 %v269, 1
    %v544 = vpop.permute.xlu0 %543
    %v545 = vlaneseq
    %v546 = vand.u32 %v545, 127
    %vm547 = vcmp.lt.s32.totalorder %v546, 1
    %v548 = vsel %vm547, %v530, %v538
    %v549 = vsel %vm547, %v532, %v540
    %v550 = vsel %vm547, %v534, %v542
    %v551 = vsel %vm547, %v536, %v544
    %v552 = vsel %vm547, %v538, %v530
    %v553 = vsel %vm547, %v540, %v532
    %v554 = vsel %vm547, %v542, %v534
    %v555 = vsel %vm547, %v544, %v536
    %556 = vrot.lane.b32.xlu0 %v249, 127
    %v557 = vpop.permute.xlu0 %556
    %558 = vrot.lane.b32.xlu0 %v255, 127
    %v559 = vpop.permute.xlu0 %558
    %560 = vrot.lane.b32.xlu0 %v261, 127
    %v561 = vpop.permute.xlu0 %560
    %562 = vrot.lane.b32.xlu0 %v267, 127
    %v563 = vpop.permute.xlu0 %562
    %564 = vrot.lane.b32.xlu0 %v251, 127
    %v565 = vpop.permute.xlu0 %564
    %566 = vrot.lane.b32.xlu0 %v257, 127
    %v567 = vpop.permute.xlu0 %566
    %568 = vrot.lane.b32.xlu0 %v263, 127
    %v569 = vpop.permute.xlu0 %568
    %570 = vrot.lane.b32.xlu0 %v269, 127
    %v571 = vpop.permute.xlu0 %570
    %vm572 = vcmp.lt.s32.totalorder %v546, 127
    %v573 = vsel %vm572, %v557, %v565
    %v574 = vsel %vm572, %v559, %v567
    %v575 = vsel %vm572, %v561, %v569
    %v576 = vsel %vm572, %v563, %v571
    %v577 = vsel %vm572, %v565, %v557
    %v578 = vsel %vm572, %v567, %v559
    %v579 = vsel %vm572, %v569, %v561
    %v580 = vsel %vm572, %v571, %v563
    %v581 = vadd.s32 %v546, 128
    %vm582 = vcmp.lt.s32.totalorder %v546, 0
    %v583 = vsub.s32 0, %v546
    %v584 = vsel %vm582, %v583, %v546
    %v585 = vshrl.u32 %v584, 1
    %v586 = vand.u32 %v584, 1
    %v587 = vsub.s32 0, %v586
    %v588 = vsel %vm582, %v587, %v586
    %vm589 = vcmp.lt.s32.totalorder %v581, 0
    %v590 = vsub.s32 0, %v581
    %v591 = vsel %vm589, %v590, %v581
    %v592 = vshrl.u32 %v591, 1
    %v593 = vand.u32 %v591, 1
    %v594 = vsub.s32 0, %v593
    %v595 = vsel %vm589, %v594, %v593
    %vm596 = vcmp.ne.s32.totalorder %v588, 0
    %vm597 = vcmp.ne.s32.totalorder %v595, 0
    %vm598 = vcmp.lt.s32.totalorder %v588, 0
    %vm599 = vcmp.lt.s32.totalorder %v595, 0
    %vm600 = vmand %vm598, %vm596
    %vm601 = vmand %vm599, %vm597
    %v602 = vadd.s32 %v588, 2
    %v603 = vadd.s32 %v595, 2
    %v604 = vsel %vm600, %v602, %v588
    %v605 = vsel %vm601, %v603, %v595
    %vm606 = vcmp.eq.s32.totalorder %v604, 0
    %vm607 = vcmp.eq.s32.totalorder %v605, 0
    %v608 = vsub.f32 0.0, %v573
    %v609 = vsub.f32 0.0, %v577
    %v610 = vsub.f32 0.0, %v574
    %v611 = vsub.f32 0.0, %v578
    %v612 = vsub.f32 0.0, %v575
    %v613 = vsub.f32 0.0, %v579
    %v614 = vsub.f32 0.0, %v576
    %v615 = vsub.f32 0.0, %v580
    %v616 = vsel %vm606, %v608, %v552
    %v617 = vsel %vm607, %v609, %v548
    %v618 = vsel %vm606, %v610, %v553
    %v619 = vsel %vm607, %v611, %v549
    %v620 = vsel %vm606, %v612, %v554
    %v621 = vsel %vm607, %v613, %v550
    %v622 = vsel %vm606, %v614, %v555
    %v623 = vsel %vm607, %v615, %v551
    %v624 = vmul.f32 %v616, %v513
    %v625 = vmul.f32 %v617, %v514
    %v626 = vmul.f32 %v618, %v515
    %v627 = vmul.f32 %v619, %v516
    %v628 = vmul.f32 %v620, %v517
    %v629 = vmul.f32 %v621, %v518
    %v630 = vmul.f32 %v622, %v519
    %v631 = vmul.f32 %v623, %v520
    %v632 = vadd.f32 %v521, %v624
    %v633 = vadd.f32 %v522, %v625
    %v634 = vadd.f32 %v523, %v626
    %v635 = vadd.f32 %v524, %v627
    %v636 = vadd.f32 %v525, %v628
    %v637 = vadd.f32 %v526, %v629
    %v638 = vadd.f32 %v527, %v630
    %v639 = vadd.f32 %v528, %v631
    %v640 = vmul.f32 %v370, %v505
    %v641 = vmul.f32 %v375, %v507
    %v642 = vmul.f32 %v380, %v509
    %v643 = vmul.f32 %v385, %v511
    %644 = vrot.lane.b32.xlu0 %v370, 1
    %v645 = vpop.permute.xlu0 %644
    %646 = vrot.lane.b32.xlu0 %v375, 1
    %v647 = vpop.permute.xlu0 %646
    %648 = vrot.lane.b32.xlu0 %v380, 1
    %v649 = vpop.permute.xlu0 %648
    %650 = vrot.lane.b32.xlu0 %v385, 1
    %v651 = vpop.permute.xlu0 %650
    %652 = vrot.lane.b32.xlu0 %v370, 127
    %v653 = vpop.permute.xlu0 %652
    %654 = vrot.lane.b32.xlu0 %v375, 127
    %v655 = vpop.permute.xlu0 %654
    %656 = vrot.lane.b32.xlu0 %v380, 127
    %v657 = vpop.permute.xlu0 %656
    %658 = vrot.lane.b32.xlu0 %v385, 127
    %v659 = vpop.permute.xlu0 %658
    %v660 = vsub.f32 0.0, %v653
    %v661 = vsub.f32 0.0, %v655
    %v662 = vsub.f32 0.0, %v657
    %v663 = vsub.f32 0.0, %v659
    %v664 = vsel %vm606, %v660, %v645
    %v665 = vsel %vm606, %v661, %v647
    %v666 = vsel %vm606, %v662, %v649
    %v667 = vsel %vm606, %v663, %v651
    %v668 = vmul.f32 %v664, %v513
    %v669 = vmul.f32 %v665, %v515
    %v670 = vmul.f32 %v666, %v517
    %v671 = vmul.f32 %v667, %v519
    %v672 = vadd.f32 %v640, %v668
    %v673 = vadd.f32 %v641, %v669
    %v674 = vadd.f32 %v642, %v670
    %v675 = vadd.f32 %v643, %v671
    %676 = vst [vmem:[#allocation13] sm:$0xff] %v632
    %677 = vst [vmem:[#allocation13 + $0x8] sm:$0xff] %v633
    %678 = vst [vmem:[#allocation13 + $0x10] sm:$0xff] %v634
    %679 = vst [vmem:[#allocation13 + $0x18] sm:$0xff] %v635
    %680 = vst [vmem:[#allocation13 + $0x20] sm:$0xff] %v636
    %681 = vst [vmem:[#allocation13 + $0x28] sm:$0xff] %v637
    %682 = vst [vmem:[#allocation13 + $0x30] sm:$0xff] %v638
    %683 = vst [vmem:[#allocation13 + $0x38] sm:$0xff] %v639
    %684 = vst [vmem:[#allocation14] sm:$0xff] %v672
    %685 = vst [vmem:[#allocation14 + $0x8] sm:$0xff] %v673
    %686 = vst [vmem:[#allocation14 + $0x10] sm:$0xff] %v674
    %687 = vst [vmem:[#allocation14 + $0x18] sm:$0xff] %v675
    %688 = vst [vmem:[#allocation16] sm:$0xff] %v487
    %689 = vst [vmem:[#allocation16 + $0x8] sm:$0xff] %v492
    %690 = vst [vmem:[#allocation16 + $0x10] sm:$0xff] %v497
    %691 = vst [vmem:[#allocation16 + $0x18] sm:$0xff] %v502
    // Predicated region
    $region50: #{tpu_custom_call.1} parent=1 // pred_check
      _
    $region51: #{tpu_custom_call.1} parent=1 // pred_check_branch
      %693 = sbr.rel (0) target = $region53
    $region52: #{tpu_custom_call.1} parent=1 // pred_region
      %s695 = ssub.s32 1024, 1024
      %696 = vsyncadd [#allocation4], %s695
      %s697 = sshll.u32 [#allocation13], 4
      %s698 = int_to_ptr.vmem [resolvable:$true] %s697
      %703 = dma.vmem_to_hbm [thread:$0]  %s698, 1024, %s6, [#allocation4], 256, 256, 16
    $region53: #{tpu_custom_call.1} parent=1 // pred_fallthru
      _
    // Predicated region
    $region54: #{tpu_custom_call.1} parent=1 // pred_check
      _
    $region55: #{tpu_custom_call.1} parent=1 // pred_check_branch
      %705 = sbr.rel (0) target = $region57
    $region56: #{tpu_custom_call.1} parent=1 // pred_region
      %s707 = ssub.s32 512, 512
      %708 = vsyncadd [#allocation15], %s707
      %s709 = sshll.u32 [#allocation14], 4
      %s710 = int_to_ptr.vmem [resolvable:$true] %s709
      %715 = dma.vmem_to_hbm [thread:$0]  %s710, 512, %s7, [#allocation15], 128, 128, 8
    $region57: #{tpu_custom_call.1} parent=1 // pred_fallthru
      _
    // Predicated region
    $region58: #{tpu_custom_call.1} parent=1 // pred_check
      _
    $region59: #{tpu_custom_call.1} parent=1 // pred_check_branch
      %717 = sbr.rel (0) target = $region61
    $region60: #{tpu_custom_call.1} parent=1 // pred_region
      %s719 = ssub.s32 512, 512
      %720 = vsyncadd [#allocation15], %s719
      %s721 = sshll.u32 [#allocation16], 4
      %s722 = int_to_ptr.vmem [resolvable:$true] %s721
      %727 = dma.vmem_to_hbm [thread:$0]  %s722, 512, %s8, [#allocation15], 128, 128, 8
    $region61: #{tpu_custom_call.1} parent=1 // pred_fallthru
      _
    // Predicated region
    $region62: #{tpu_custom_call.1} parent=1 // pred_check
      _
    $region63: #{tpu_custom_call.1} parent=1 // pred_check_branch
      %729 = sbr.rel (0) target = $region65
    $region64: #{tpu_custom_call.1} parent=1 // pred_region
      %730 = dma.done [#allocation4], 1024
    $region65: #{tpu_custom_call.1} parent=1 // pred_fallthru
      _
    // Predicated region
    $region66: #{tpu_custom_call.1} parent=1 // pred_check
      _
    $region67: #{tpu_custom_call.1} parent=1 // pred_check_branch
      %732 = sbr.rel (0) target = $region69
    $region68: #{tpu_custom_call.1} parent=1 // pred_region
      %733 = dma.done [#allocation15], 512
    $region69: #{tpu_custom_call.1} parent=1 // pred_fallthru
      _
    // Predicated region
    $region70: #{tpu_custom_call.1} parent=1 // pred_check
      _
    $region71: #{tpu_custom_call.1} parent=1 // pred_check_branch
      %735 = sbr.rel (0) target = $region73
    $region72: #{tpu_custom_call.1} parent=1 // pred_region
      %736 = dma.done [#allocation15], 512
    $region73: #{tpu_custom_call.1} parent=1 // pred_fallthru
      _
    %737 = vsyncpa [#allocation3], 1
    %738 = vsyncpa [#allocation6], 1
    %739 = vsyncpa [#allocation9], 1
    %740 = vsyncpa [#allocation12], 1
    %741 = vsyncpa [#allocation4], 1
    %742 = vsyncpa [#allocation15], 1

</llo_original>
